<compile_context>
chip_gen: v5e
topology: v5e:2x2
jax: 0.10.0
libtpu: 0.0.40
codegen_flags: <defaults>
</compile_context>

<pallas_src>
import math

import jax
import jax.numpy as jnp
from jax.experimental import pallas as pl
from jax.experimental.pallas import tpu as pltpu


def _round_up(x, m):
    return (x + m - 1) // m * m


_MIN_GRID_STEPS = 4            # keep >= 4 grid steps when N allows (v7x megacore)
_VMEM_BUDGET_BYTES = 24 << 20  # double-buffered in+out footprint budget


# ----------------------------------------------------------------------------
# Pallas kernel: per-row component log-probabilities of the GMM (lane-dense).
# ----------------------------------------------------------------------------
def _gmm_logprob_kernel(dist_ref, param_ref, out_ref):
    # dist_ref : (1, TN)      raw distances for this tile (N on lanes)
    # param_ref: (K_pad, 4)   packed per-cluster constants, columns =
    #                         [mu, a, c, bias] with a = -0.5 / sigma^2 and
    #                         c = log(w) - log(sigma) - 0.5*log(2*pi)
    # out_ref  : (K_pad, TN)  log of L1-normalized weighted component probs
    x = jnp.log(dist_ref[...])                           # (1, TN)
    # torch.nan_to_num(lp, nan=-inf): the only NaN source is log(distance),
    # so guard once per element (x -> -inf makes exp(.) -> 0 downstream).
    x = jnp.where(jnp.isnan(x), -jnp.inf, x)

    prm = param_ref[...]                                 # (K_pad, 4)
    mu = prm[:, 0:1]                                     # (K_pad, 1)
    a = prm[:, 1:2]                                      # (K_pad, 1)  -0.5/sigma^2
    c = prm[:, 2:3]                                      # (K_pad, 1)
    bias = prm[:, 3:4]                                   # (K_pad, 1)

    t = x - mu                                           # (K_pad, TN)
    # exp(Normal.log_prob(x)) * w  ==  exp(a*t^2 + c)
    p = jnp.exp(a * (t * t) + c) + bias                  # (K_pad, TN), >= 0

    # F.normalize(p, p=1, dim=1): p / max(sum(p), 1e-12)  (p >= 0, no abs).
    denom = jnp.maximum(jnp.sum(p, axis=0, keepdims=True), 1e-12)  # (1, TN)
    out_ref[...] = (jnp.log(p) - jnp.log(denom)).astype(out_ref.dtype)


def _choose_tile(n, k_pad, tn):
    """Lane tile: big (amortize per-step overhead), but >= 4 grid steps when
    possible (v7x megacore + pipelining) and within the VMEM budget (input
    block is sublane-padded to 8 rows; input and output double-buffered)."""
    n128 = _round_up(n, 128)
    tile = min(int(tn), n128)
    cap_steps = (n128 // _MIN_GRID_STEPS) // 128 * 128
    if cap_steps >= 128:
        tile = min(tile, cap_steps)
    bytes_per_lane = 2 * (8 + k_pad) * 4          # 2 buffers * (in 8 rows + out K_pad rows) * f32
    cap_vmem = (_VMEM_BUDGET_BYTES // bytes_per_lane) // 128 * 128
    tile = min(tile, max(128, cap_vmem))
    return max(128, _round_up(tile, 128))


def gmm_component_logprobs(distance_flat, means, stds, weights, bias, *,
                           tn=65536, out_dtype=jnp.float32, layout="nk"):
    """distance_flat: (N,) floats. Returns (N, K) ("nk") or (K, N) ("kn")
    component log-probs in `out_dtype` (default float32; bf16 halves the
    dominant HBM write stream but loosens accuracy)."""
    n = distance_flat.shape[0]
    k = means.shape[0]
    k_pad = _round_up(k, 8)

    # Fold per-cluster constants (O(K) work, plain JAX).
    inv_sigma = 1.0 / stds
    a = -0.5 * inv_sigma * inv_sigma
    c = jnp.log(weights) - jnp.log(stds) - 0.5 * math.log(2.0 * math.pi)
    prm = jnp.stack(
        [means.astype(jnp.float32),
         a.astype(jnp.float32),
         c.astype(jnp.float32),
         bias.astype(jnp.float32)], axis=1)              # (K, 4)
    if k_pad > k:
        # Pad clusters: a finite negative (avoids 0*inf NaN when x = -inf),
        # c = -inf -> exp(.) = 0, bias = 0 -> p = 0 (no denom contribution).
        pad = jnp.concatenate(
            [jnp.zeros((k_pad - k, 1), jnp.float32),
             jnp.full((k_pad - k, 1), -1.0, jnp.float32),
             jnp.full((k_pad - k, 1), -jnp.inf, jnp.float32),
             jnp.zeros((k_pad - k, 1), jnp.float32)], axis=1)
        prm = jnp.concatenate([prm, pad], axis=0)        # (K_pad, 4)

    # Lane-dense tiling: pad N up to a multiple of the lane tile.
    tile = _choose_tile(n, k_pad, tn)
    n_pad = _round_up(n, tile)
    dist = jnp.pad(distance_flat.astype(jnp.float32).reshape(-1),
                   (0, n_pad - n), constant_values=1.0).reshape(1, n_pad)

    # Explicit VMEM accounting (input block sublane-padded to 8 rows, both
    # streams double-buffered) so the pipeline stays at full depth on all
    # generations (v7x: 64 MiB physical / 32 MiB default scoped).
    vmem_need = 2 * (8 + k_pad) * tile * 4 + 2 * (8 * 128 * 4)
    vmem_limit = max(vmem_need + (2 << 20), 16 << 20)

    cost = pl.CostEstimate(
        flops=8 * k_pad * n_pad,
        transcendentals=2 * k_pad * n_pad + 2 * n_pad,
        bytes_accessed=(k_pad * n_pad + n_pad + 4 * k_pad) * 4)

    out_kn = pl.pallas_call(
        _gmm_logprob_kernel,
        out_shape=jax.ShapeDtypeStruct((k_pad, n_pad), out_dtype),
        grid_spec=pltpu.PrefetchScalarGridSpec(
            num_scalar_prefetch=0,
            grid=(n_pad // tile,),
            in_specs=[
                pl.BlockSpec((1, tile), lambda i: (0, i)),     # distances
                pl.BlockSpec((k_pad, 4), lambda i: (0, 0)),    # packed params
            ],
            out_specs=pl.BlockSpec((k_pad, tile), lambda i: (0, i)),
        ),
        compiler_params=pltpu.CompilerParams(
            dimension_semantics=("parallel",),
            vmem_limit_bytes=vmem_limit),
        cost_estimate=cost,
    )(dist, prm)

    if layout == "kn":
        # K-major output for consumers that reduce/index along axis 0 —
        # avoids re-streaming the whole output through HBM.
        return out_kn[:k, :n]
    # Torch contract is (N, K): single relayout, kept outside the kernel
    # (in-kernel transpose would force K-lane masked stores). Known cost.
    return out_kn[:k, :n].T


# ----------------------------------------------------------------------------
# Parameter preprocessing (O(K) glue, plain JAX) — mirrors decoder_gmm.forward
# up to the construction of the sorted GMM parameters.
# ----------------------------------------------------------------------------
def _fc(stds_l, stds_r, k):
    k = jax.nn.sigmoid(jnp.clip(k, -jnp.log(9.0), 9.0))
    rate = stds_l / stds_r
    kr = jnp.clip(k * rate, 1e-8, 0.9)
    return stds_l * jnp.sqrt(-2.0 * jnp.log(kr) + 1e-8)


def prepare_gmm_params(k_param, distance_stdevs, interval, cweight):
    # Precondition (documented, per review): stds >= 0.001 and softmax
    # weights > 0 keep all folded constants finite, so the single NaN guard
    # on log(distance) inside the kernel matches torch.nan_to_num(lp).
    weights = jax.nn.softmax(cweight)                          # mixture probs
    stds = jnp.maximum(distance_stdevs, 0.0) + 0.001           # relu + 0.001
    d_left = jnp.cumsum(_fc(stds, stds, k_param))
    d_right = _fc(stds[:-1], stds[1:], k_param[1:])
    d_right = jnp.concatenate([jnp.zeros((1,), dtype=d_right.dtype), d_right])
    means = d_left + d_right
    means = jnp.minimum(means + interval, 5.0)                 # clamp(max=5.0)
    mode = jnp.exp(means - stds ** 2)
    idx = jnp.argsort(mode)                                    # ascending sort
    return means[idx], stds[idx], weights


def decoder_gmm_forward(distance, params, *, tn=65536,
                        out_dtype=jnp.float32, layout="nk"):
    # Note (matches torch source): bias is applied in the original (unsorted)
    # cluster order while means/stds are sorted by mode.
    means, stds, weights = prepare_gmm_params(
        params["k"], params["distance_stdevs"], params["interval"],
        params["cweight"])
    lp = gmm_component_logprobs(
        distance.reshape(-1), means, stds, weights, params["bias"],
        tn=tn, out_dtype=out_dtype, layout=layout)
    # TODO(synk): torch returns a D.MixtureSameFamily distribution object;
    # it is represented here by its (means, stds, weights) parameter triple.
    return ([lp.astype(jnp.float32)], [(means, stds, weights)])


# ----------------------------------------------------------------------------
# Deterministic parameter construction (matches decoder_gmm.__init__)
# ----------------------------------------------------------------------------
def init_decoder_gmm_params(num_clusters):
    return {
        "k": jnp.ones((num_clusters,), jnp.float32),
        # self.means is unused in forward(), kept for parity:
        "means": jnp.linspace(0.0, 4.0, num_clusters, dtype=jnp.float32),
        "distance_stdevs": 0.3 * jnp.ones((num_clusters,), jnp.float32),
        "interval": jnp.linspace(0.0, 0.1, num_clusters, dtype=jnp.float32),
        "cweight": jnp.zeros((num_clusters,), jnp.float32),
        "bias": jnp.linspace(1e-8, 1e-5, num_clusters, dtype=jnp.float32),
    }


# ----------------------------------------------------------------------------
# Pure-JAX reference (torch-style, unfused math) for a correctness check.
# ----------------------------------------------------------------------------
def _reference(distance, params):
    means, stds, weights = prepare_gmm_params(
        params["k"], params["distance_stdevs"], params["interval"],
        params["cweight"])
    x = jnp.log(distance.reshape(-1, 1))
    z = (x - means[None, :]) / stds[None, :]
    lp = -0.5 * z * z - jnp.log(stds)[None, :] - 0.5 * math.log(2.0 * math.pi)
    lp = jnp.where(jnp.isnan(lp), -jnp.inf, lp)
    p = jnp.exp(lp) * weights[None, :] + params["bias"][None, :]
    denom = jnp.maximum(jnp.sum(jnp.abs(p), axis=1, keepdims=True), 1e-12)
    return jnp.log(p / denom)


if __name__ == "__main__":
    num_clusters = 8
    params = init_decoder_gmm_params(num_clusters)

    # Small positive "distance" input, e.g. (2, 64) -> N = 128 rows.
    key = jax.random.PRNGKey(0)
    distance = jax.random.uniform(
        key, (2, 64), dtype=jnp.float32, minval=0.1, maxval=10.0)

    (lp_list, gmm_list) = decoder_gmm_forward(distance, params)
    lp = jax.block_until_ready(lp_list[0])

    ref = _reference(distance, params)
    assert lp.shape == (128, num_clusters)
    assert jnp.allclose(lp, ref, atol=1e-4, rtol=1e-4), "mismatch vs reference"

    # Also sanity-check the K-major (transpose-free) layout path.
    (lp_kn_list, _) = decoder_gmm_forward(distance, params, layout="kn")
    lp_kn = jax.block_until_ready(lp_kn_list[0])
    assert lp_kn.shape == (num_clusters, 128)
    assert jnp.allclose(lp_kn.T, ref, atol=1e-4, rtol=1e-4), "kn layout mismatch"

    print("KERNEL_OK")
</pallas_src>

<mosaic_0001>
module attributes {stable_mosaic.version = 11 : i64} {
  func.func @_gmm_logprob_kernel(%arg0: i32, %arg1: memref<1x128xf32, #tpu.memory_space<vmem>>, %arg2: memref<8x4xf32, #tpu.memory_space<vmem>>, %arg3: memref<8x128xf32, #tpu.memory_space<vmem>>) attributes {dimension_semantics = [#tpu.dimension_semantics<parallel>], iteration_bounds = array<i64: 1>, scalar_prefetch = 0 : i64, scratch_operands = 0 : i64, tpu.core_type = #tpu.core_type<tc>, window_params = [{transform_indices = @transform_0, window_bounds = array<i64: 1, 128>}, {pipeline_mode = #tpu.pipeline_mode<synchronous>, transform_indices = @transform_1, window_bounds = array<i64: 8, 4>}, {transform_indices = @transform_2, window_bounds = array<i64: 8, 128>}]} {
    %c0 = arith.constant 0 : index
    %c0_0 = arith.constant 0 : index
    %0 = vector.load %arg1[%c0, %c0_0] : memref<1x128xf32, #tpu.memory_space<vmem>>, vector<1x128xf32>
    %1 = math.log %0 : vector<1x128xf32>
    %2 = arith.cmpf one, %1, %1 : vector<1x128xf32>
    %cst = arith.constant 0xFF800000 : f32
    %3 = vector.broadcast %cst : f32 to vector<1x128xf32>
    %4 = arith.select %2, %3, %1 : vector<1x128xi1>, vector<1x128xf32>
    %c0_1 = arith.constant 0 : index
    %c0_2 = arith.constant 0 : index
    %5 = vector.load %arg2[%c0_1, %c0_2] : memref<8x4xf32, #tpu.memory_space<vmem>>, vector<8x4xf32>
    %6 = vector.extract_strided_slice %5 {offsets = [0, 0], sizes = [8, 1], strides = [1, 1]} : vector<8x4xf32> to vector<8x1xf32>
    %7 = vector.extract_strided_slice %5 {offsets = [0, 1], sizes = [8, 1], strides = [1, 1]} : vector<8x4xf32> to vector<8x1xf32>
    %8 = vector.extract_strided_slice %5 {offsets = [0, 2], sizes = [8, 1], strides = [1, 1]} : vector<8x4xf32> to vector<8x1xf32>
    %9 = vector.extract_strided_slice %5 {offsets = [0, 3], sizes = [8, 1], strides = [1, 1]} : vector<8x4xf32> to vector<8x1xf32>
    %10 = vector.broadcast %4 : vector<1x128xf32> to vector<8x128xf32>
    %11 = vector.broadcast %6 : vector<8x1xf32> to vector<8x128xf32>
    %12 = arith.subf %10, %11 : vector<8x128xf32>
    %13 = arith.mulf %12, %12 : vector<8x128xf32>
    %14 = vector.broadcast %7 : vector<8x1xf32> to vector<8x128xf32>
    %15 = arith.mulf %14, %13 : vector<8x128xf32>
    %16 = vector.broadcast %8 : vector<8x1xf32> to vector<8x128xf32>
    %17 = arith.addf %15, %16 : vector<8x128xf32>
    %18 = math.exp %17 : vector<8x128xf32>
    %19 = vector.broadcast %9 : vector<8x1xf32> to vector<8x128xf32>
    %20 = arith.addf %18, %19 : vector<8x128xf32>
    %cst_3 = arith.constant dense<0.000000e+00> : vector<128xf32>
    %21 = vector.multi_reduction <add>, %20, %cst_3 [0] : vector<8x128xf32> to vector<128xf32>
    %22 = vector.shape_cast %21 : vector<128xf32> to vector<1x128xf32>
    %cst_4 = arith.constant 9.99999996E-13 : f32
    %23 = vector.broadcast %cst_4 : f32 to vector<1x128xf32>
    %24 = arith.maximumf %22, %23 : vector<1x128xf32>
    %25 = math.log %20 : vector<8x128xf32>
    %26 = math.log %24 : vector<1x128xf32>
    %27 = vector.broadcast %26 : vector<1x128xf32> to vector<8x128xf32>
    %28 = arith.subf %25, %27 : vector<8x128xf32>
    %c0_5 = arith.constant 0 : index
    %c0_6 = arith.constant 0 : index
    %29 = vector.load %arg3[%c0_5, %c0_6] : memref<8x128xf32, #tpu.memory_space<vmem>>, vector<8x128xf32>
    tpu.vector_store %arg3[%c0_5, %c0_6], %28 {strides = array<i32>} : memref<8x128xf32, #tpu.memory_space<vmem>>, vector<8x128xf32>,
    return
  }
  func.func @transform_0(%arg0: i32) -> (i32, i32) {
    %c0_i32 = arith.constant 0 : i32
    %c0_i32_0 = arith.constant 0 : i32
    return %c0_i32, %arg0 : i32, i32
  }
  func.func @transform_1(%arg0: i32) -> (i32, i32) {
    %c0_i32 = arith.constant 0 : i32
    %c0_i32_0 = arith.constant 0 : i32
    %c0_i32_1 = arith.constant 0 : i32
    return %c0_i32, %c0_i32_0 : i32, i32
  }
  func.func @transform_2(%arg0: i32) -> (i32, i32) {
    %c0_i32 = arith.constant 0 : i32
    %c0_i32_0 = arith.constant 0 : i32
    return %c0_i32, %arg0 : i32, i32
  }
}

</mosaic_0001>

<llo_original>
// kernel: tpu_custom_call.1
$region0: #{tpu_custom_call.1}
  #allocation0 [shape = 'u32[]', space=smem, size = 0x4, offset = 0x4, fixed_abs, tag = 'smem constant byte address 0x4 - core index']
  #allocation1 [shape = 'u32[72,128]{1,0:T(1,128)}', space=vmem, size = 0x9000, scoped, tag = 'internal scratch']
  %s0 = inlined_call_operand.vmem [shape: f32[1,128], index: 0, kind: input, shape index: {}]
  %s1 = inlined_call_operand.vmem [shape: f32[8,4], index: 1, kind: input, shape index: {}]
  %s2 = inlined_call_operand.hbm [shape: f32[8,128], index: 2, kind: output, shape index: {}]
  %s3 = sld [smem:[#allocation0]]
  $region18: #{tpu_custom_call.1} parent=0
    _
  %s5 = ssub.s32 1, %s3
  %s6 = scalar_select 0, %s5, %s3
  $region1: #{tpu_custom_call.1} parent=0
    #allocation2 [shape = 'u8[4096]{0}', space=vmem, size = 0x1000, scoped, tag = 'output window, operand 0, single buffered']
    #allocation3 [shape = 's32[1]{0}', space=sflag, size = 0x4, scoped, tag = 'scoped memory for tpu_custom_call.1']
    %7 = vsyncpa [#allocation3], 0
    // Predicated region
    $region2: #{tpu_custom_call.1} parent=1 // pred_check
      _
    $region3: #{tpu_custom_call.1} parent=1 // pred_check_branch
      %9 = sbr.rel (0) target = $region5
    $region4: #{tpu_custom_call.1} parent=1 // pred_region
      _
    $region5: #{tpu_custom_call.1} parent=1 // pred_fallthru
      _
    // Predicated region
    $region6: #{tpu_custom_call.1} parent=1 // pred_check
      _
    $region7: #{tpu_custom_call.1} parent=1 // pred_check_branch
      %11 = sbr.rel (0) target = $region9
    $region8: #{tpu_custom_call.1} parent=1 // pred_region
      _
    $region9: #{tpu_custom_call.1} parent=1 // pred_fallthru
      _
    %v12 = vld [vmem:[%s0] sm:$0x1]
    %v13 = vlog2.pop %v12
    %v14 = vmul.f32 %v13, 0.6931472
    %vm15 = vcmp.ne.f32.partialorder %v14, %v14
    %v16 = vsel %vm15, -inf, %v14
    %v17 = vld [vmem:[%s1] sm:$0xff]
    %v19 = vperm.slane %v16, 0
    %22 = vset.pattern.permute.xlu0 0
    %23 = vperm.xlu0 %22, %v17
    %v24 = vpop.permute.xlu0 %23
    %v26 = vsub.f32 %v19, %v24
    %v27 = vmul.f32 %v26, %v26
    %28 = vset.pattern.permute.xlu0 1
    %29 = vperm.xlu0 %28, %v17
    %v30 = vpop.permute.xlu0 %29
    %v32 = vmul.f32 %v30, %v27
    %33 = vset.pattern.permute.xlu0 2
    %34 = vperm.xlu0 %33, %v17
    %v35 = vpop.permute.xlu0 %34
    %v37 = vadd.f32 %v32, %v35
    %v38 = vmul.f32 %v37, 1.442695
    %v39 = vpow.pop %v38
    %40 = vset.pattern.permute.xlu0 3
    %41 = vperm.xlu0 %40, %v17
    %v42 = vpop.permute.xlu0 %41
    %v44 = vadd.f32 %v39, %v42
    %v45 = vrot.slane %v44, 4
    %v46 = vadd.f32 %v44, %v45
    %v47 = vrot.slane %v46, 2
    %v48 = vadd.f32 %v46, %v47
    %v49 = vrot.slane %v48, 1
    %v50 = vadd.f32 %v48, %v49
    %v51 = vmax.f32 %v50, 1e-12
    %v52 = vlog2.pop %v44
    %v53 = vmul.f32 %v52, 0.6931472
    %v54 = vlog2.pop %v51
    %v55 = vmul.f32 %v54, 0.6931472
    %v56 = vsub.f32 %v53, %v55
    %57 = vst [vmem:[#allocation2] sm:$0xff] %v56
    // Predicated region
    $region10: #{tpu_custom_call.1} parent=1 // pred_check
      _
    $region11: #{tpu_custom_call.1} parent=1 // pred_check_branch
      %59 = sbr.rel (0) target = $region13
    $region12: #{tpu_custom_call.1} parent=1 // pred_region
      %61 = vsyncadd [#allocation3], 0
      %s63 = sshll.u32 [#allocation2], 4
      %s64 = int_to_ptr.vmem [resolvable:$true] %s63
      %s65 = sshll.u32 %s2, 4
      %s66 = int_to_ptr.hbm [resolvable:$true] %s65
      %68 = dma.vmem_to_hbm [thread:$0]  %s64, 128, %s66, [#allocation3]
    $region13: #{tpu_custom_call.1} parent=1 // pred_fallthru
      _
    // Predicated region
    $region14: #{tpu_custom_call.1} parent=1 // pred_check
      _
    $region15: #{tpu_custom_call.1} parent=1 // pred_check_branch
      %70 = sbr.rel (0) target = $region17
    $region16: #{tpu_custom_call.1} parent=1 // pred_region
      %72 = dma.done [#allocation3], 128
    $region17: #{tpu_custom_call.1} parent=1 // pred_fallthru
      _
    %73 = vsyncpa [#allocation3], 1

</llo_original>
